<compile_context>
chip_gen: v7x
topology: tpu7x:2x2x1
jax: 0.10.0
libtpu: 0.0.40
codegen_flags: <defaults>
</compile_context>

<pallas_src>
import functools

import jax
import jax.numpy as jnp
from jax.experimental import pallas as pl
from jax.experimental.pallas import tpu as pltpu


def _round_up(n, m):
    return ((n + m - 1) // m) * m


# ----------------------------------------------------------------------------- kernel


def _film_kernel(x_ref, emb_ref,
                 wmod_ref, bmod_ref,   # fused modulation Linear: (Hp, 5Hp), (1, 5Hp)
                 wf1_ref, bf1_ref,     # feed_forward Linear 1:   (Hp, Hp),  (1, Hp)
                 wf2_ref, bf2_ref,     # feed_forward Linear 2:   (Hp, Hp),  (1, Hp)
                 o_ref,
                 *, hidden_dim):
    eps = 1e-6
    H = hidden_dim                     # real feature width (static)
    Hp = x_ref.shape[-1]               # lane-padded width (multiple of 128)

    x = x_ref[...].astype(jnp.float32)     # (TB, Hp)
    emb = emb_ref[...].astype(jnp.float32)  # (TB, Hp)

    # SiLU(embedding) — shared input of both (fused) modulation heads.
    s = emb * jax.nn.sigmoid(emb)

    # One fused MXU pass: (TB, Hp) @ (Hp, 5Hp) -> alpha|beta1|gamma1|beta2|gamma2.
    cdt = wmod_ref.dtype  # bf16 weights -> bf16 MXU inputs, f32 accumulation.
    mod = jnp.dot(s.astype(cdt), wmod_ref[...],
                  preferred_element_type=jnp.float32) + bmod_ref[...]
    alpha = mod[:, 0 * Hp:1 * Hp]
    beta1 = mod[:, 1 * Hp:2 * Hp]
    gamma1 = mod[:, 2 * Hp:3 * Hp]
    beta2 = mod[:, 3 * Hp:4 * Hp]
    gamma2 = mod[:, 4 * Hp:5 * Hp]

    # LayerNorm over the REAL H lanes (padded lanes masked out, divisor 1/H).
    if Hp != H:
        lane = jax.lax.broadcasted_iota(jnp.int32, (1, Hp), 1)
        mask = (lane < H).astype(jnp.float32)
    else:
        mask = None
    inv_h = 1.0 / H

    def layer_norm(v):
        if mask is None:
            mu = jnp.sum(v, axis=-1, keepdims=True) * inv_h
            d = v - mu
        else:
            mu = jnp.sum(v * mask, axis=-1, keepdims=True) * inv_h
            d = (v - mu) * mask
        var = jnp.sum(d * d, axis=-1, keepdims=True) * inv_h
        return d * jax.lax.rsqrt(var + eps)

    # feed_forward( norm1(x) * (1 + gamma1) + beta1 )  with tanh-GELU.
    h = layer_norm(x) * (1.0 + gamma1) + beta1
    h = jnp.dot(h.astype(cdt), wf1_ref[...],
                preferred_element_type=jnp.float32) + bf1_ref[...]
    c = 0.7978845608028654  # sqrt(2/pi)
    h = 0.5 * h * (1.0 + jnp.tanh(c * (h + 0.044715 * h * h * h)))
    h = jnp.dot(h.astype(cdt), wf2_ref[...],
                preferred_element_type=jnp.float32) + bf2_ref[...]

    # residual FiLM update + second modulation.
    x2 = x + alpha * h
    o_ref[...] = (layer_norm(x2) * (1.0 + gamma2) + beta2).astype(o_ref.dtype)


# ----------------------------------------------------------------------------- wrapper


@jax.jit
def film_forward(x, category, kp):
    """FiLMLayer.forward.  x: (B, H) float32, category: (B,) int32.

    `kp` is the pre-processed (padded / transposed / fused / bf16) parameter
    dict produced once by `prepare_kernel_params`.
    """
    B, H = x.shape
    Hp = kp["w_mod"].shape[0]

    # Batch tiling: multiple of 8 sublanes, up to 256 rows per grid step.
    TB = min(256, _round_up(B, 8))
    Bp = _round_up(B, TB)

    # Glue outside the kernel: batch/lane padding + embedding gather.
    xp = jnp.pad(x.astype(jnp.float32), ((0, Bp - B), (0, Hp - H)))
    cat = jnp.pad(category, (0, Bp - B))
    emb = kp["embedding"][cat]                      # (Bp, Hp) gather

    row_spec = pl.BlockSpec((TB, Hp), lambda i: (i, 0))

    def fixed(shape):  # VMEM-resident across all grid steps
        return pl.BlockSpec(shape, lambda i: (0, 0))

    weight_bytes = sum(int(kp[k].size) * kp[k].dtype.itemsize
                       for k in ("w_mod", "b_mod", "wf1", "bf1", "wf2", "bf2"))
    act_bytes = 3 * 2 * TB * Hp * 4                 # x/emb/out, double-buffered
    tmp_bytes = TB * 9 * Hp * 4                     # mod (5Hp) + intermediates
    vmem_limit = int(min(64 * 2**20,
                         max(2 * weight_bytes + act_bytes + tmp_bytes, 32 * 2**20)))

    cost = pl.CostEstimate(
        flops=2 * Bp * Hp * 7 * Hp,                 # (5H + H + H) output columns
        transcendentals=3 * Bp * Hp,
        bytes_accessed=weight_bytes + 3 * Bp * Hp * 4,
    )

    out = pl.pallas_call(
        functools.partial(_film_kernel, hidden_dim=H),
        out_shape=jax.ShapeDtypeStruct((Bp, Hp), x.dtype),
        grid=(Bp // TB,),
        in_specs=[
            row_spec,                    # x
            row_spec,                    # emb
            fixed((Hp, 5 * Hp)),         # fused modulation weight
            fixed((1, 5 * Hp)),          # fused modulation bias
            fixed((Hp, Hp)),             # ff1 weight
            fixed((1, Hp)),              # ff1 bias
            fixed((Hp, Hp)),             # ff2 weight
            fixed((1, Hp)),              # ff2 bias
        ],
        out_specs=row_spec,
        compiler_params=pltpu.CompilerParams(
            dimension_semantics=("parallel",),
            vmem_limit_bytes=vmem_limit),
        cost_estimate=cost,
    )(xp, emb, kp["w_mod"], kp["b_mod"], kp["wf1"], kp["bf1"], kp["wf2"], kp["bf2"])

    return out[:B, :H]


# ----------------------------------------------------------------------------- params


def init_params(key, num_categories, hidden_dim):
    """Raw, PyTorch-layout parameters (Linear weights are (out, in), f32)."""
    ks = jax.random.split(key, 9)
    H = hidden_dim
    sc = 1.0 / jnp.sqrt(H)
    return {
        "embedding": jax.random.normal(ks[0], (num_categories, H), jnp.float32),
        "mod1_w": jax.random.uniform(ks[1], (3 * H, H), jnp.float32, -sc, sc),
        "mod1_b": jax.random.uniform(ks[2], (3 * H,), jnp.float32, -sc, sc),
        "mod2_w": jax.random.uniform(ks[3], (2 * H, H), jnp.float32, -sc, sc),
        "mod2_b": jax.random.uniform(ks[4], (2 * H,), jnp.float32, -sc, sc),
        "ff1_w": jax.random.uniform(ks[5], (H, H), jnp.float32, -sc, sc),
        "ff1_b": jax.random.uniform(ks[6], (H,), jnp.float32, -sc, sc),
        "ff2_w": jax.random.uniform(ks[7], (H, H), jnp.float32, -sc, sc),
        "ff2_b": jax.random.uniform(ks[8], (H,), jnp.float32, -sc, sc),
    }


def prepare_kernel_params(raw, weight_dtype=jnp.bfloat16):
    """One-time prep: transpose to (in, out), fuse mod1+mod2, pad lanes to 128,
    cast matmul weights to `weight_dtype`.  Done at init, NOT per forward call."""
    H = raw["ff1_w"].shape[0]
    Hp = _round_up(H, 128)

    def pad2(w):
        return jnp.pad(w, ((0, Hp - w.shape[0]), (0, Hp - w.shape[1])))

    def pad1(b):
        return jnp.pad(b, (0, Hp - b.shape[0]))

    w1t = raw["mod1_w"].T                               # (H, 3H)
    w2t = raw["mod2_w"].T                               # (H, 2H)
    w_chunks = ([w1t[:, i * H:(i + 1) * H] for i in range(3)]
                + [w2t[:, i * H:(i + 1) * H] for i in range(2)])
    b_chunks = ([raw["mod1_b"][i * H:(i + 1) * H] for i in range(3)]
                + [raw["mod2_b"][i * H:(i + 1) * H] for i in range(2)])

    w_mod = jnp.concatenate([pad2(c) for c in w_chunks], axis=1).astype(weight_dtype)
    b_mod = jnp.concatenate([pad1(c) for c in b_chunks])[None, :].astype(jnp.float32)

    return {
        "embedding": jnp.pad(raw["embedding"], ((0, 0), (0, Hp - H))).astype(jnp.float32),
        "w_mod": w_mod,                                                    # (Hp, 5Hp)
        "b_mod": b_mod,                                                    # (1, 5Hp)
        "wf1": pad2(raw["ff1_w"].T).astype(weight_dtype),                  # (Hp, Hp)
        "bf1": pad1(raw["ff1_b"])[None, :].astype(jnp.float32),            # (1, Hp)
        "wf2": pad2(raw["ff2_w"].T).astype(weight_dtype),                  # (Hp, Hp)
        "bf2": pad1(raw["ff2_b"])[None, :].astype(jnp.float32),            # (1, Hp)
    }


# ----------------------------------------------------------------------------- reference


def film_reference(x, category, raw, matmul_dtype=jnp.float32):
    """Pure-JAX reference matching the PyTorch forward (matmul inputs cast to
    `matmul_dtype`, f32 accumulation, so it can mirror the kernel's precision)."""
    eps = 1e-6

    def mm(a, w_t, b):  # w_t is torch-layout (out, in)
        return jnp.dot(a.astype(matmul_dtype), w_t.T.astype(matmul_dtype),
                       preferred_element_type=jnp.float32) + b

    def ln(v):
        mu = jnp.mean(v, -1, keepdims=True)
        var = jnp.mean((v - mu) ** 2, -1, keepdims=True)
        return (v - mu) * jax.lax.rsqrt(var + eps)

    emb = raw["embedding"][category]
    s = emb * jax.nn.sigmoid(emb)

    mod1 = mm(s, raw["mod1_w"], raw["mod1_b"])
    alpha, beta1, gamma1 = jnp.split(mod1, 3, axis=-1)

    h = ln(x) * (1 + gamma1) + beta1
    h = mm(h, raw["ff1_w"], raw["ff1_b"])
    h = 0.5 * h * (1 + jnp.tanh(0.7978845608028654 * (h + 0.044715 * h ** 3)))
    h = mm(h, raw["ff2_w"], raw["ff2_b"])
    x2 = x + alpha * h

    mod2 = mm(s, raw["mod2_w"], raw["mod2_b"])
    beta2, gamma2 = jnp.split(mod2, 2, axis=-1)
    return ln(x2) * (1 + gamma2) + beta2


# ----------------------------------------------------------------------------- main


if __name__ == "__main__":
    num_categories = 6
    hidden_dim = 32
    batch = 8

    key = jax.random.PRNGKey(0)
    kparam, kx, kc = jax.random.split(key, 3)
    raw = init_params(kparam, num_categories, hidden_dim)
    kernel_params = prepare_kernel_params(raw, weight_dtype=jnp.bfloat16)

    x = jax.random.normal(kx, (batch, hidden_dim), jnp.float32)
    category = jax.random.randint(kc, (batch,), 0, num_categories, jnp.int32)

    out = jax.block_until_ready(film_forward(x, category, kernel_params))
    assert out.shape == (batch, hidden_dim)

    ref_match = film_reference(x, category, raw, matmul_dtype=jnp.bfloat16)
    ref_f32 = film_reference(x, category, raw, matmul_dtype=jnp.float32)
    assert jnp.allclose(out, ref_match, atol=2e-3, rtol=2e-3), "mismatch vs precision-matched reference"
    assert jnp.allclose(out, ref_f32, atol=5e-2, rtol=5e-2), "mismatch vs f32 reference"

    # Second config: exercises lane padding (H=96 -> 128), batch padding and a
    # multi-step (pipelined, megacore-parallel) grid.
    b2, h2 = 260, 96
    raw2 = init_params(jax.random.PRNGKey(1), num_categories, h2)
    kp2 = prepare_kernel_params(raw2, weight_dtype=jnp.bfloat16)
    x2 = jax.random.normal(jax.random.PRNGKey(2), (b2, h2), jnp.float32)
    c2 = jax.random.randint(jax.random.PRNGKey(3), (b2,), 0, num_categories, jnp.int32)
    out2 = jax.block_until_ready(film_forward(x2, c2, kp2))
    assert out2.shape == (b2, h2)
    ref2 = film_reference(x2, c2, raw2, matmul_dtype=jnp.bfloat16)
    assert jnp.allclose(out2, ref2, atol=2e-3, rtol=2e-3), "mismatch (config 2)"

    print("KERNEL_OK")
</pallas_src>

<mosaic_0001>
module attributes {stable_mosaic.version = 11 : i64} {
  func.func @_film_kernel(%arg0: i32, %arg1: memref<8x128xf32, #tpu.memory_space<vmem>>, %arg2: memref<8x128xf32, #tpu.memory_space<vmem>>, %arg3: memref<128x640xbf16, #tpu.memory_space<vmem>>, %arg4: memref<1x640xf32, #tpu.memory_space<vmem>>, %arg5: memref<128x128xbf16, #tpu.memory_space<vmem>>, %arg6: memref<1x128xf32, #tpu.memory_space<vmem>>, %arg7: memref<128x128xbf16, #tpu.memory_space<vmem>>, %arg8: memref<1x128xf32, #tpu.memory_space<vmem>>, %arg9: memref<8x128xf32, #tpu.memory_space<vmem>>) attributes {dimension_semantics = [#tpu.dimension_semantics<parallel>], iteration_bounds = array<i64: 1>, scalar_prefetch = 0 : i64, scratch_operands = 0 : i64, tpu.core_type = #tpu.core_type<tc>, window_params = [{transform_indices = @transform_0, window_bounds = array<i64: 8, 128>}, {transform_indices = @transform_1, window_bounds = array<i64: 8, 128>}, {pipeline_mode = #tpu.pipeline_mode<synchronous>, transform_indices = @transform_2, window_bounds = array<i64: 128, 640>}, {pipeline_mode = #tpu.pipeline_mode<synchronous>, transform_indices = @transform_3, window_bounds = array<i64: 1, 640>}, {pipeline_mode = #tpu.pipeline_mode<synchronous>, transform_indices = @transform_4, window_bounds = array<i64: 128, 128>}, {pipeline_mode = #tpu.pipeline_mode<synchronous>, transform_indices = @transform_5, window_bounds = array<i64: 1, 128>}, {pipeline_mode = #tpu.pipeline_mode<synchronous>, transform_indices = @transform_6, window_bounds = array<i64: 128, 128>}, {pipeline_mode = #tpu.pipeline_mode<synchronous>, transform_indices = @transform_7, window_bounds = array<i64: 1, 128>}, {transform_indices = @transform_8, window_bounds = array<i64: 8, 128>}]} {
    %c0 = arith.constant 0 : index
    %c0_0 = arith.constant 0 : index
    %0 = vector.load %arg1[%c0, %c0_0] : memref<8x128xf32, #tpu.memory_space<vmem>>, vector<8x128xf32>
    %c0_1 = arith.constant 0 : index
    %c0_2 = arith.constant 0 : index
    %1 = vector.load %arg2[%c0_1, %c0_2] : memref<8x128xf32, #tpu.memory_space<vmem>>, vector<8x128xf32>
    %2 = arith.negf %1 : vector<8x128xf32>
    %3 = math.exp %2 : vector<8x128xf32>
    %cst = arith.constant 1.000000e+00 : f32
    %4 = vector.broadcast %cst : f32 to vector<8x128xf32>
    %5 = arith.addf %4, %3 : vector<8x128xf32>
    %6 = arith.divf %4, %5 : vector<8x128xf32>
    %7 = arith.mulf %1, %6 : vector<8x128xf32>
    %8 = arith.truncf %7 : vector<8x128xf32> to vector<8x128xbf16>
    %c0_3 = arith.constant 0 : index
    %c0_4 = arith.constant 0 : index
    %9 = vector.load %arg3[%c0_3, %c0_4] : memref<128x640xbf16, #tpu.memory_space<vmem>>, vector<128x640xbf16>
    %cst_5 = arith.constant dense<0.000000e+00> : vector<8x640xf32>
    %10 = tpu.matmul %8, %9, %cst_5 {dimension_numbers = #tpu.dot_dimension_numbers<[1], [0], [0], [1], [0, 0, 1, 1], [], []>} : vector<8x128xbf16>, vector<128x640xbf16>, vector<8x640xf32> -> vector<8x640xf32>
    %c0_6 = arith.constant 0 : index
    %c0_7 = arith.constant 0 : index
    %11 = vector.load %arg4[%c0_6, %c0_7] : memref<1x640xf32, #tpu.memory_space<vmem>>, vector<1x640xf32>
    %12 = vector.broadcast %11 : vector<1x640xf32> to vector<8x640xf32>
    %13 = arith.addf %10, %12 : vector<8x640xf32>
    %14 = vector.extract_strided_slice %13 {offsets = [0, 0], sizes = [8, 128], strides = [1, 1]} : vector<8x640xf32> to vector<8x128xf32>
    %15 = vector.extract_strided_slice %13 {offsets = [0, 128], sizes = [8, 128], strides = [1, 1]} : vector<8x640xf32> to vector<8x128xf32>
    %16 = vector.extract_strided_slice %13 {offsets = [0, 256], sizes = [8, 128], strides = [1, 1]} : vector<8x640xf32> to vector<8x128xf32>
    %17 = vector.extract_strided_slice %13 {offsets = [0, 384], sizes = [8, 128], strides = [1, 1]} : vector<8x640xf32> to vector<8x128xf32>
    %18 = vector.extract_strided_slice %13 {offsets = [0, 512], sizes = [8, 128], strides = [1, 1]} : vector<8x640xf32> to vector<8x128xf32>
    %19 = tpu.iota {dimensions = array<i32: 1>} : vector<1x128xi32>
    %c32_i32 = arith.constant 32 : i32
    %20 = vector.broadcast %c32_i32 : i32 to vector<1x128xi32>
    %21 = arith.cmpi slt, %19, %20 : vector<1x128xi32>
    %22 = arith.extui %21 : vector<1x128xi1> to vector<1x128xi32>
    %23 = arith.sitofp %22 : vector<1x128xi32> to vector<1x128xf32>
    %24 = vector.broadcast %23 : vector<1x128xf32> to vector<8x128xf32>
    %25 = arith.mulf %0, %24 : vector<8x128xf32>
    %cst_8 = arith.constant dense<0.000000e+00> : vector<8xf32>
    %26 = vector.multi_reduction <add>, %25, %cst_8 [1] : vector<8x128xf32> to vector<8xf32>
    %27 = vector.shape_cast %26 : vector<8xf32> to vector<8x1xf32>
    %cst_9 = arith.constant 3.125000e-02 : f32
    %28 = vector.broadcast %cst_9 : f32 to vector<8x1xf32>
    %29 = arith.mulf %27, %28 : vector<8x1xf32>
    %30 = vector.broadcast %29 : vector<8x1xf32> to vector<8x128xf32>
    %31 = arith.subf %0, %30 : vector<8x128xf32>
    %32 = vector.broadcast %23 : vector<1x128xf32> to vector<8x128xf32>
    %33 = arith.mulf %31, %32 : vector<8x128xf32>
    %34 = arith.mulf %33, %33 : vector<8x128xf32>
    %cst_10 = arith.constant dense<0.000000e+00> : vector<8xf32>
    %35 = vector.multi_reduction <add>, %34, %cst_10 [1] : vector<8x128xf32> to vector<8xf32>
    %36 = vector.shape_cast %35 : vector<8xf32> to vector<8x1xf32>
    %cst_11 = arith.constant 3.125000e-02 : f32
    %37 = vector.broadcast %cst_11 : f32 to vector<8x1xf32>
    %38 = arith.mulf %36, %37 : vector<8x1xf32>
    %cst_12 = arith.constant 9.99999997E-7 : f32
    %39 = vector.broadcast %cst_12 : f32 to vector<8x1xf32>
    %40 = arith.addf %38, %39 : vector<8x1xf32>
    %41 = math.rsqrt %40 : vector<8x1xf32>
    %42 = vector.broadcast %41 : vector<8x1xf32> to vector<8x128xf32>
    %43 = arith.mulf %33, %42 : vector<8x128xf32>
    %cst_13 = arith.constant 1.000000e+00 : f32
    %44 = vector.broadcast %cst_13 : f32 to vector<8x128xf32>
    %45 = arith.addf %44, %16 : vector<8x128xf32>
    %46 = arith.mulf %43, %45 : vector<8x128xf32>
    %47 = arith.addf %46, %15 : vector<8x128xf32>
    %48 = arith.truncf %47 : vector<8x128xf32> to vector<8x128xbf16>
    %c0_14 = arith.constant 0 : index
    %c0_15 = arith.constant 0 : index
    %49 = vector.load %arg5[%c0_14, %c0_15] : memref<128x128xbf16, #tpu.memory_space<vmem>>, vector<128x128xbf16>
    %cst_16 = arith.constant dense<0.000000e+00> : vector<8x128xf32>
    %50 = tpu.matmul %48, %49, %cst_16 {dimension_numbers = #tpu.dot_dimension_numbers<[1], [0], [0], [1], [0, 0, 1, 1], [], []>} : vector<8x128xbf16>, vector<128x128xbf16>, vector<8x128xf32> -> vector<8x128xf32>
    %c0_17 = arith.constant 0 : index
    %c0_18 = arith.constant 0 : index
    %51 = vector.load %arg6[%c0_17, %c0_18] : memref<1x128xf32, #tpu.memory_space<vmem>>, vector<1x128xf32>
    %52 = vector.broadcast %51 : vector<1x128xf32> to vector<8x128xf32>
    %53 = arith.addf %50, %52 : vector<8x128xf32>
    %cst_19 = arith.constant 5.000000e-01 : f32
    %54 = vector.broadcast %cst_19 : f32 to vector<8x128xf32>
    %55 = arith.mulf %54, %53 : vector<8x128xf32>
    %cst_20 = arith.constant 4.471500e-02 : f32
    %56 = vector.broadcast %cst_20 : f32 to vector<8x128xf32>
    %57 = arith.mulf %56, %53 : vector<8x128xf32>
    %58 = arith.mulf %57, %53 : vector<8x128xf32>
    %59 = arith.mulf %58, %53 : vector<8x128xf32>
    %60 = arith.addf %53, %59 : vector<8x128xf32>
    %cst_21 = arith.constant 0.797884583 : f32
    %61 = vector.broadcast %cst_21 : f32 to vector<8x128xf32>
    %62 = arith.mulf %61, %60 : vector<8x128xf32>
    %63 = math.tanh %62 : vector<8x128xf32>
    %cst_22 = arith.constant 1.000000e+00 : f32
    %64 = vector.broadcast %cst_22 : f32 to vector<8x128xf32>
    %65 = arith.addf %64, %63 : vector<8x128xf32>
    %66 = arith.mulf %55, %65 : vector<8x128xf32>
    %67 = arith.truncf %66 : vector<8x128xf32> to vector<8x128xbf16>
    %c0_23 = arith.constant 0 : index
    %c0_24 = arith.constant 0 : index
    %68 = vector.load %arg7[%c0_23, %c0_24] : memref<128x128xbf16, #tpu.memory_space<vmem>>, vector<128x128xbf16>
    %cst_25 = arith.constant dense<0.000000e+00> : vector<8x128xf32>
    %69 = tpu.matmul %67, %68, %cst_25 {dimension_numbers = #tpu.dot_dimension_numbers<[1], [0], [0], [1], [0, 0, 1, 1], [], []>} : vector<8x128xbf16>, vector<128x128xbf16>, vector<8x128xf32> -> vector<8x128xf32>
    %c0_26 = arith.constant 0 : index
    %c0_27 = arith.constant 0 : index
    %70 = vector.load %arg8[%c0_26, %c0_27] : memref<1x128xf32, #tpu.memory_space<vmem>>, vector<1x128xf32>
    %71 = vector.broadcast %70 : vector<1x128xf32> to vector<8x128xf32>
    %72 = arith.addf %69, %71 : vector<8x128xf32>
    %73 = arith.mulf %14, %72 : vector<8x128xf32>
    %74 = arith.addf %0, %73 : vector<8x128xf32>
    %75 = vector.broadcast %23 : vector<1x128xf32> to vector<8x128xf32>
    %76 = arith.mulf %74, %75 : vector<8x128xf32>
    %cst_28 = arith.constant dense<0.000000e+00> : vector<8xf32>
    %77 = vector.multi_reduction <add>, %76, %cst_28 [1] : vector<8x128xf32> to vector<8xf32>
    %78 = vector.shape_cast %77 : vector<8xf32> to vector<8x1xf32>
    %cst_29 = arith.constant 3.125000e-02 : f32
    %79 = vector.broadcast %cst_29 : f32 to vector<8x1xf32>
    %80 = arith.mulf %78, %79 : vector<8x1xf32>
    %81 = vector.broadcast %80 : vector<8x1xf32> to vector<8x128xf32>
    %82 = arith.subf %74, %81 : vector<8x128xf32>
    %83 = vector.broadcast %23 : vector<1x128xf32> to vector<8x128xf32>
    %84 = arith.mulf %82, %83 : vector<8x128xf32>
    %85 = arith.mulf %84, %84 : vector<8x128xf32>
    %cst_30 = arith.constant dense<0.000000e+00> : vector<8xf32>
    %86 = vector.multi_reduction <add>, %85, %cst_30 [1] : vector<8x128xf32> to vector<8xf32>
    %87 = vector.shape_cast %86 : vector<8xf32> to vector<8x1xf32>
    %cst_31 = arith.constant 3.125000e-02 : f32
    %88 = vector.broadcast %cst_31 : f32 to vector<8x1xf32>
    %89 = arith.mulf %87, %88 : vector<8x1xf32>
    %cst_32 = arith.constant 9.99999997E-7 : f32
    %90 = vector.broadcast %cst_32 : f32 to vector<8x1xf32>
    %91 = arith.addf %89, %90 : vector<8x1xf32>
    %92 = math.rsqrt %91 : vector<8x1xf32>
    %93 = vector.broadcast %92 : vector<8x1xf32> to vector<8x128xf32>
    %94 = arith.mulf %84, %93 : vector<8x128xf32>
    %cst_33 = arith.constant 1.000000e+00 : f32
    %95 = vector.broadcast %cst_33 : f32 to vector<8x128xf32>
    %96 = arith.addf %95, %18 : vector<8x128xf32>
    %97 = arith.mulf %94, %96 : vector<8x128xf32>
    %98 = arith.addf %97, %17 : vector<8x128xf32>
    %c0_34 = arith.constant 0 : index
    %c0_35 = arith.constant 0 : index
    %99 = vector.load %arg9[%c0_34, %c0_35] : memref<8x128xf32, #tpu.memory_space<vmem>>, vector<8x128xf32>
    tpu.vector_store %arg9[%c0_34, %c0_35], %98 {strides = array<i32>} : memref<8x128xf32, #tpu.memory_space<vmem>>, vector<8x128xf32>,
    return
  }
  func.func @transform_0(%arg0: i32) -> (i32, i32) {
    %c0_i32 = arith.constant 0 : i32
    %c0_i32_0 = arith.constant 0 : i32
    return %arg0, %c0_i32 : i32, i32
  }
  func.func @transform_1(%arg0: i32) -> (i32, i32) {
    %c0_i32 = arith.constant 0 : i32
    %c0_i32_0 = arith.constant 0 : i32
    return %arg0, %c0_i32 : i32, i32
  }
  func.func @transform_2(%arg0: i32) -> (i32, i32) {
    %c0_i32 = arith.constant 0 : i32
    %c0_i32_0 = arith.constant 0 : i32
    %c0_i32_1 = arith.constant 0 : i32
    return %c0_i32, %c0_i32_0 : i32, i32
  }
  func.func @transform_3(%arg0: i32) -> (i32, i32) {
    %c0_i32 = arith.constant 0 : i32
    %c0_i32_0 = arith.constant 0 : i32
    %c0_i32_1 = arith.constant 0 : i32
    return %c0_i32, %c0_i32_0 : i32, i32
  }
  func.func @transform_4(%arg0: i32) -> (i32, i32) {
    %c0_i32 = arith.constant 0 : i32
    %c0_i32_0 = arith.constant 0 : i32
    %c0_i32_1 = arith.constant 0 : i32
    return %c0_i32, %c0_i32_0 : i32, i32
  }
  func.func @transform_5(%arg0: i32) -> (i32, i32) {
    %c0_i32 = arith.constant 0 : i32
    %c0_i32_0 = arith.constant 0 : i32
    %c0_i32_1 = arith.constant 0 : i32
    return %c0_i32, %c0_i32_0 : i32, i32
  }
  func.func @transform_6(%arg0: i32) -> (i32, i32) {
    %c0_i32 = arith.constant 0 : i32
    %c0_i32_0 = arith.constant 0 : i32
    %c0_i32_1 = arith.constant 0 : i32
    return %c0_i32, %c0_i32_0 : i32, i32
  }
  func.func @transform_7(%arg0: i32) -> (i32, i32) {
    %c0_i32 = arith.constant 0 : i32
    %c0_i32_0 = arith.constant 0 : i32
    %c0_i32_1 = arith.constant 0 : i32
    return %c0_i32, %c0_i32_0 : i32, i32
  }
  func.func @transform_8(%arg0: i32) -> (i32, i32) {
    %c0_i32 = arith.constant 0 : i32
    %c0_i32_0 = arith.constant 0 : i32
    return %arg0, %c0_i32 : i32, i32
  }
}

</mosaic_0001>

<llo_original>
// kernel: film_forward.1
$region0: #{film_forward.1}
  #allocation0 [shape = 'u32[]', space=smem, size = 0x4, offset = 0x4, fixed_abs, tag = 'smem constant byte address 0x4 - core index']
  #allocation1 [shape = 'u32[144,128]{1,0:T(1,128)}', space=vmem, size = 0x12000, scoped, tag = 'internal scratch']
  %s0 = inlined_call_operand.vmem [shape: f32[8,128], index: 0, kind: input, shape index: {}]
  %s1 = inlined_call_operand.vmem [shape: f32[8,128], index: 1, kind: input, shape index: {}]
  %s2 = inlined_call_operand.hbm [shape: bf16[128,640], index: 2, kind: input, shape index: {}]
  %s3 = inlined_call_operand.hbm [shape: f32[1,640], index: 3, kind: input, shape index: {}]
  %s4 = inlined_call_operand.vmem [shape: bf16[128,128], index: 4, kind: input, shape index: {}]
  %s5 = inlined_call_operand.vmem [shape: f32[1,128], index: 5, kind: input, shape index: {}]
  %s6 = inlined_call_operand.vmem [shape: bf16[128,128], index: 6, kind: input, shape index: {}]
  %s7 = inlined_call_operand.hbm [shape: f32[1,128], index: 7, kind: input, shape index: {}]
  %s8 = inlined_call_operand.hbm [shape: f32[8,128], index: 8, kind: output, shape index: {}]
  %s9 = sld [smem:[#allocation0]]
  $region54: #{film_forward.1} parent=0
    _
  %s11 = ssub.s32 1, %s9
  %s12 = scalar_select 0, %s11, %s9
  $region1: #{film_forward.1} parent=0
    #allocation2 [shape = 'u8[163840]{0}', space=vmem, size = 0x28000, scoped, tag = 'input window, operand 2, single buffered']
    #allocation3 [shape = 's32[1]{0}', space=sflag, size = 0x4, scoped, tag = 'scoped memory for film_forward.1']
    #allocation4 [shape = 's32[1]{0}', space=sflag, size = 0x4, scoped, tag = 'scoped memory for film_forward.1']
    #allocation5 [shape = 'u8[2560]{0}', space=vmem, size = 0xc00, scoped, tag = 'input window, operand 3, single buffered']
    #allocation6 [shape = 's32[1]{0}', space=sflag, size = 0x4, scoped, tag = 'scoped memory for film_forward.1']
    #allocation7 [shape = 'u8[512]{0}', space=vmem, size = 0x400, scoped, tag = 'input window, operand 7, single buffered']
    #allocation8 [shape = 'u8[4096]{0}', space=vmem, size = 0x1000, scoped, tag = 'output window, operand 0, single buffered']
    %13 = vsyncpa [#allocation3], 0
    %14 = vsyncpa [#allocation6], 0
    %15 = vsyncpa [#allocation4], 0
    // Predicated region
    $region2: #{film_forward.1} parent=1 // pred_check
      _
    $region3: #{film_forward.1} parent=1 // pred_check_branch
      %17 = sbr.rel (0) target = $region5
    $region4: #{film_forward.1} parent=1 // pred_region
      _
    $region5: #{film_forward.1} parent=1 // pred_fallthru
      _
    // Predicated region
    $region6: #{film_forward.1} parent=1 // pred_check
      _
    $region7: #{film_forward.1} parent=1 // pred_check_branch
      %19 = sbr.rel (0) target = $region9
    $region8: #{film_forward.1} parent=1 // pred_region
      _
    $region9: #{film_forward.1} parent=1 // pred_fallthru
      _
    // Predicated region
    $region10: #{film_forward.1} parent=1 // pred_check
      _
    $region11: #{film_forward.1} parent=1 // pred_check_branch
      %21 = sbr.rel (0) target = $region13
    $region12: #{film_forward.1} parent=1 // pred_region
      %s23 = ssub.s32 5120, 5120
      %24 = vsyncadd [#allocation3], %s23
      %s25 = sshll.u32 [#allocation2], 4
      %s26 = int_to_ptr.vmem [resolvable:$true] %s25
      %31 = dma.hbm_to_vmem [thread:$0]  %s2, 5120, %s26, [#allocation3], 320, 320, 20
    $region13: #{film_forward.1} parent=1 // pred_fallthru
      _
    // Predicated region
    $region14: #{film_forward.1} parent=1 // pred_check
      _
    $region15: #{film_forward.1} parent=1 // pred_check_branch
      %33 = sbr.rel (0) target = $region17
    $region16: #{film_forward.1} parent=1 // pred_region
      %s35 = ssub.s32 80, 80
      %36 = vsyncadd [#allocation6], %s35
      %s38 = sshll.u32 [#allocation5], 4
      %s39 = int_to_ptr.vmem [resolvable:$true] %s38
      %41 = dma.hbm_to_vmem [thread:$0]  %s3, 80, %s39, [#allocation6]
    $region17: #{film_forward.1} parent=1 // pred_fallthru
      _
    // Predicated region
    $region18: #{film_forward.1} parent=1 // pred_check
      _
    $region19: #{film_forward.1} parent=1 // pred_check_branch
      %43 = sbr.rel (0) target = $region21
    $region20: #{film_forward.1} parent=1 // pred_region
      _
    $region21: #{film_forward.1} parent=1 // pred_fallthru
      _
    // Predicated region
    $region22: #{film_forward.1} parent=1 // pred_check
      _
    $region23: #{film_forward.1} parent=1 // pred_check_branch
      %45 = sbr.rel (0) target = $region25
    $region24: #{film_forward.1} parent=1 // pred_region
      _
    $region25: #{film_forward.1} parent=1 // pred_fallthru
      _
    // Predicated region
    $region26: #{film_forward.1} parent=1 // pred_check
      _
    $region27: #{film_forward.1} parent=1 // pred_check_branch
      %47 = sbr.rel (0) target = $region29
    $region28: #{film_forward.1} parent=1 // pred_region
      _
    $region29: #{film_forward.1} parent=1 // pred_fallthru
      _
    // Predicated region
    $region30: #{film_forward.1} parent=1 // pred_check
      _
    $region31: #{film_forward.1} parent=1 // pred_check_branch
      %49 = sbr.rel (0) target = $region33
    $region32: #{film_forward.1} parent=1 // pred_region
      %s51 = ssub.s32 16, 16
      %52 = vsyncadd [#allocation6], %s51
      %s54 = sshll.u32 [#allocation7], 4
      %s55 = int_to_ptr.vmem [resolvable:$true] %s54
      %57 = dma.hbm_to_vmem [thread:$0]  %s7, 16, %s55, [#allocation6]
    $region33: #{film_forward.1} parent=1 // pred_fallthru
      _
    // Predicated region
    $region34: #{film_forward.1} parent=1 // pred_check
      _
    $region35: #{film_forward.1} parent=1 // pred_check_branch
      %59 = sbr.rel (0) target = $region37
    $region36: #{film_forward.1} parent=1 // pred_region
      %60 = dma.done [#allocation3], 5120
    $region37: #{film_forward.1} parent=1 // pred_fallthru
      _
    // Predicated region
    $region38: #{film_forward.1} parent=1 // pred_check
      _
    $region39: #{film_forward.1} parent=1 // pred_check_branch
      %62 = sbr.rel (0) target = $region41
    $region40: #{film_forward.1} parent=1 // pred_region
      %63 = dma.done [#allocation6], 80
    $region41: #{film_forward.1} parent=1 // pred_fallthru
      _
    // Predicated region
    $region42: #{film_forward.1} parent=1 // pred_check
      _
    $region43: #{film_forward.1} parent=1 // pred_check_branch
      %65 = sbr.rel (0) target = $region45
    $region44: #{film_forward.1} parent=1 // pred_region
      %66 = dma.done [#allocation6], 16
    $region45: #{film_forward.1} parent=1 // pred_fallthru
      _
    %v68 = vld [vmem:[%s0] sm:$0xff]
    %v69 = vld [vmem:[%s1] sm:$0xff]
    %v70 = vxor.u32 %v69, 2147483648
    %v71 = vmul.f32 %v70, 1.442695
    %v72 = vpow.pop %v71
    %v73 = vadd.f32 %v72, 1.0
    %v74 = vrcp.pop %v73
    %v75 = vmul.f32 1.0, %v74
    %v76 = vmul.f32 %v69, %v75
    %v77 = vpack.c.bf16 %v76, %v76
    %v78 = vld [vmem:[#allocation2] sm:$0xff]
    %v79 = vld [vmem:[#allocation2 + $0x8] sm:$0xff]
    %v80 = vld [vmem:[#allocation2 + $0x10] sm:$0xf]
    %v81 = vld [vmem:[#allocation2 + $0x14] sm:$0xff]
    %v82 = vld [vmem:[#allocation2 + $0x1c] sm:$0xff]
    %v83 = vld [vmem:[#allocation2 + $0x24] sm:$0xf]
    %v84 = vld [vmem:[#allocation2 + $0x28] sm:$0xff]
    %v85 = vld [vmem:[#allocation2 + $0x30] sm:$0xff]
    %v86 = vld [vmem:[#allocation2 + $0x38] sm:$0xf]
    %v87 = vld [vmem:[#allocation2 + $0x3c] sm:$0xff]
    %v88 = vld [vmem:[#allocation2 + $0x44] sm:$0xff]
    %v89 = vld [vmem:[#allocation2 + $0x4c] sm:$0xf]
    %v90 = vld [vmem:[#allocation2 + $0x50] sm:$0xff]
    %v91 = vld [vmem:[#allocation2 + $0x58] sm:$0xff]
    %v92 = vld [vmem:[#allocation2 + $0x60] sm:$0xf]
    %v93 = vld [vmem:[#allocation2 + $0x64] sm:$0xff]
    %v94 = vld [vmem:[#allocation2 + $0x6c] sm:$0xff]
    %v95 = vld [vmem:[#allocation2 + $0x74] sm:$0xf]
    %v96 = vld [vmem:[#allocation2 + $0x78] sm:$0xff]
    %v97 = vld [vmem:[#allocation2 + $0x80] sm:$0xff]
    %v98 = vld [vmem:[#allocation2 + $0x88] sm:$0xf]
    %v99 = vld [vmem:[#allocation2 + $0x8c] sm:$0xff]
    %v100 = vld [vmem:[#allocation2 + $0x94] sm:$0xff]
    %v101 = vld [vmem:[#allocation2 + $0x9c] sm:$0xf]
    %v102 = vld [vmem:[#allocation2 + $0xa0] sm:$0xff]
    %v103 = vld [vmem:[#allocation2 + $0xa8] sm:$0xff]
    %v104 = vld [vmem:[#allocation2 + $0xb0] sm:$0xf]
    %v105 = vld [vmem:[#allocation2 + $0xb4] sm:$0xff]
    %v106 = vld [vmem:[#allocation2 + $0xbc] sm:$0xff]
    %v107 = vld [vmem:[#allocation2 + $0xc4] sm:$0xf]
    %v108 = vld [vmem:[#allocation2 + $0xc8] sm:$0xff]
    %v109 = vld [vmem:[#allocation2 + $0xd0] sm:$0xff]
    %v110 = vld [vmem:[#allocation2 + $0xd8] sm:$0xf]
    %v111 = vld [vmem:[#allocation2 + $0xdc] sm:$0xff]
    %v112 = vld [vmem:[#allocation2 + $0xe4] sm:$0xff]
    %v113 = vld [vmem:[#allocation2 + $0xec] sm:$0xf]
    %v114 = vld [vmem:[#allocation2 + $0xf0] sm:$0xff]
    %v115 = vld [vmem:[#allocation2 + $0xf8] sm:$0xff]
    %v116 = vld [vmem:[#allocation2 + $0x100] sm:$0xf]
    %v117 = vld [vmem:[#allocation2 + $0x104] sm:$0xff]
    %v118 = vld [vmem:[#allocation2 + $0x10c] sm:$0xff]
    %v119 = vld [vmem:[#allocation2 + $0x114] sm:$0xf]
    %v120 = vld [vmem:[#allocation2 + $0x118] sm:$0xff]
    %v121 = vld [vmem:[#allocation2 + $0x120] sm:$0xff]
    %v122 = vld [vmem:[#allocation2 + $0x128] sm:$0xf]
    %v123 = vld [vmem:[#allocation2 + $0x12c] sm:$0xff]
    %v124 = vld [vmem:[#allocation2 + $0x134] sm:$0xff]
    %v125 = vld [vmem:[#allocation2 + $0x13c] sm:$0xf]
    %v126 = vld [vmem:[#allocation5] sm:$0x1f]
    %v128 = vlaneseq
    %v129 = vshrl.u32 %v128, 7
    %v130 = vsub.s32 0, %v129
    %v131 = vrot.slane %v126, %v130
    %v132 = vlaneseq
    %v133 = vshrl.u32 %v132, 7
    %v134 = vsub.s32 1, %v133
    %v135 = vrot.slane %v126, %v134
    %v136 = vlaneseq
    %v137 = vshrl.u32 %v136, 7
    %v138 = vsub.s32 2, %v137
    %v139 = vrot.slane %v126, %v138
    %v140 = vlaneseq
    %v141 = vshrl.u32 %v140, 7
    %v142 = vsub.s32 3, %v141
    %v143 = vrot.slane %v126, %v142
    %v144 = vlaneseq
    %v145 = vshrl.u32 %v144, 7
    %v146 = vsub.s32 4, %v145
    %v147 = vrot.slane %v126, %v146
    %v201 = vunpack.c.l.b16 %v78
    %v202 = vunpack.c.h.b16 %v78
    %v203 = vunpack.c.l.b16 %v79
    %v204 = vunpack.c.h.b16 %v79
    %v205 = vunpack.c.l.b16 %v80
    %v206 = vunpack.c.l.b16 %v81
    %v207 = vunpack.c.h.b16 %v81
    %v208 = vunpack.c.l.b16 %v82
    %v209 = vunpack.c.h.b16 %v82
    %v210 = vunpack.c.l.b16 %v83
    %v211 = vunpack.c.l.b16 %v84
    %v212 = vunpack.c.h.b16 %v84
    %v213 = vunpack.c.l.b16 %v85
    %v214 = vunpack.c.h.b16 %v85
    %v215 = vunpack.c.l.b16 %v86
    %v216 = vunpack.c.l.b16 %v87
    %v217 = vunpack.c.h.b16 %v87
    %v218 = vunpack.c.l.b16 %v88
    %v219 = vunpack.c.h.b16 %v88
    %v220 = vunpack.c.l.b16 %v89
    %v221 = vunpack.c.l.b16 %v90
    %v222 = vunpack.c.h.b16 %v90
    %v223 = vunpack.c.l.b16 %v91
    %v224 = vunpack.c.h.b16 %v91
    %v225 = vunpack.c.l.b16 %v92
    %v226 = vunpack.c.l.b16 %v93
    %v227 = vunpack.c.h.b16 %v93
    %v228 = vunpack.c.l.b16 %v94
    %v229 = vunpack.c.h.b16 %v94
    %v230 = vunpack.c.l.b16 %v95
    %v231 = vunpack.c.l.b16 %v96
    %v232 = vunpack.c.h.b16 %v96
    %v233 = vunpack.c.l.b16 %v97
    %v234 = vunpack.c.h.b16 %v97
    %v235 = vunpack.c.l.b16 %v98
    %v236 = vunpack.c.l.b16 %v99
    %v237 = vunpack.c.h.b16 %v99
    %v238 = vunpack.c.l.b16 %v100
    %v239 = vunpack.c.h.b16 %v100
    %v240 = vunpack.c.l.b16 %v101
    %v241 = vunpack.c.l.b16 %v102
    %v242 = vunpack.c.h.b16 %v102
    %v243 = vunpack.c.l.b16 %v103
    %v244 = vunpack.c.h.b16 %v103
    %v245 = vunpack.c.l.b16 %v104
    %v246 = vunpack.c.l.b16 %v105
    %v247 = vunpack.c.h.b16 %v105
    %v248 = vunpack.c.l.b16 %v106
    %v249 = vunpack.c.h.b16 %v106
    %v250 = vunpack.c.l.b16 %v107
    %v251 = vunpack.c.l.b16 %v108
    %v252 = vunpack.c.h.b16 %v108
    %v253 = vunpack.c.l.b16 %v109
    %v254 = vunpack.c.h.b16 %v109
    %v255 = vunpack.c.l.b16 %v110
    %v256 = vunpack.c.l.b16 %v111
    %v257 = vunpack.c.h.b16 %v111
    %v258 = vunpack.c.l.b16 %v112
    %v259 = vunpack.c.h.b16 %v112
    %v260 = vunpack.c.l.b16 %v113
    %v261 = vunpack.c.l.b16 %v114
    %v262 = vunpack.c.h.b16 %v114
    %v263 = vunpack.c.l.b16 %v115
    %v264 = vunpack.c.h.b16 %v115
    %v265 = vunpack.c.l.b16 %v116
    %v266 = vunpack.c.l.b16 %v117
    %v267 = vunpack.c.h.b16 %v117
    %v268 = vunpack.c.l.b16 %v118
    %v269 = vunpack.c.h.b16 %v118
    %v270 = vunpack.c.l.b16 %v119
    %v271 = vunpack.c.l.b16 %v120
    %v272 = vunpack.c.h.b16 %v120
    %v273 = vunpack.c.l.b16 %v121
    %v274 = vunpack.c.h.b16 %v121
    %v275 = vunpack.c.l.b16 %v122
    %v276 = vunpack.c.l.b16 %v123
    %v277 = vunpack.c.h.b16 %v123
    %v278 = vunpack.c.l.b16 %v124
    %v279 = vunpack.c.h.b16 %v124
    %v280 = vunpack.c.l.b16 %v125
    %v281 = vpack.c.b16 %v206, %v201
    %v282 = vpack.c.b16 %v207, %v202
    %v283 = vpack.c.b16 %v208, %v203
    %v284 = vpack.c.b16 %v209, %v204
    %v285 = vpack.c.b16 %v210, %v205
    %v286 = vpack.c.b16 %v216, %v211
    %v287 = vpack.c.b16 %v217, %v212
    %v288 = vpack.c.b16 %v218, %v213
    %v289 = vpack.c.b16 %v219, %v214
    %v290 = vpack.c.b16 %v220, %v215
    %v291 = vpack.c.b16 %v226, %v221
    %v292 = vpack.c.b16 %v227, %v222
    %v293 = vpack.c.b16 %v228, %v223
    %v294 = vpack.c.b16 %v229, %v224
    %v295 = vpack.c.b16 %v230, %v225
    %v296 = vpack.c.b16 %v236, %v231
    %v297 = vpack.c.b16 %v237, %v232
    %v298 = vpack.c.b16 %v238, %v233
    %v299 = vpack.c.b16 %v239, %v234
    %v300 = vpack.c.b16 %v240, %v235
    %v301 = vpack.c.b16 %v246, %v241
    %v302 = vpack.c.b16 %v247, %v242
    %v303 = vpack.c.b16 %v248, %v243
    %v304 = vpack.c.b16 %v249, %v244
    %v305 = vpack.c.b16 %v250, %v245
    %v306 = vpack.c.b16 %v256, %v251
    %v307 = vpack.c.b16 %v257, %v252
    %v308 = vpack.c.b16 %v258, %v253
    %v309 = vpack.c.b16 %v259, %v254
    %v310 = vpack.c.b16 %v260, %v255
    %v311 = vpack.c.b16 %v266, %v261
    %v312 = vpack.c.b16 %v267, %v262
    %v313 = vpack.c.b16 %v268, %v263
    %v314 = vpack.c.b16 %v269, %v264
    %v315 = vpack.c.b16 %v270, %v265
    %v316 = vpack.c.b16 %v276, %v271
    %v317 = vpack.c.b16 %v277, %v272
    %v318 = vpack.c.b16 %v278, %v273
    %v319 = vpack.c.b16 %v279, %v274
    %v320 = vpack.c.b16 %v280, %v275
    %361 = vmatprep.subr.bf16.mxu0 %v282
    %362 = vmatpush1.bf16.msra.mxu0 %v281
    %363 = vmatprep.subr.bf16.mxu0 %v287
    %364 = vmatpush1.bf16.msra.mxu0 %v286
    %365 = vmatprep.subr.bf16.mxu0 %v292
    %366 = vmatpush1.bf16.msra.mxu0 %v291
    %367 = vmatprep.subr.bf16.mxu0 %v297
    %368 = vmatpush1.bf16.msra.mxu0 %v296
    %369 = vmatprep.subr.bf16.mxu0 %v302
    %370 = vmatpush1.bf16.msra.mxu0 %v301
    %371 = vmatprep.subr.bf16.mxu0 %v307
    %372 = vmatpush1.bf16.msra.mxu0 %v306
    %373 = vmatprep.subr.bf16.mxu0 %v312
    %374 = vmatpush1.bf16.msra.mxu0 %v311
    %375 = vmatprep.subr.bf16.mxu0 %v317
    %376 = vmatpush1.bf16.msra.mxu0 %v316
    %377 = vmatprep.subr.bf16.mxu0 0
    %378 = vmatpush1.bf16.msra.mxu0 0
    %379 = vmatprep.subr.bf16.mxu0 0
    %380 = vmatpush1.bf16.msra.mxu0 0
    %381 = vmatprep.subr.bf16.mxu0 0
    %382 = vmatpush1.bf16.msra.mxu0 0
    %383 = vmatprep.subr.bf16.mxu0 0
    %384 = vmatpush1.bf16.msra.mxu0 0
    %385 = vmatprep.subr.bf16.mxu0 0
    %386 = vmatpush1.bf16.msra.mxu0 0
    %387 = vmatprep.subr.bf16.mxu0 0
    %388 = vmatpush1.bf16.msra.mxu0 0
    %389 = vmatprep.subr.bf16.mxu0 0
    %390 = vmatpush1.bf16.msra.mxu0 0
    %391 = vmatprep.subr.bf16.mxu0 0
    %392 = vmatpush1.bf16.msra.mxu0 0
    %393 = vmatprep.mubr.bf16.mxu0 0
    %394 = vmatmul.mubr.bf16.gmra.mrb[0].mxu0 %v77
    %v395 = vpop.f32.mrb[0].mxu0
    %v396 = vadd.f32 %v131, %v395
    %v397 = vpop.f32.mrb[0].mxu0
    %v398 = vadd.f32 %v135, %v397
    %v399 = vpop.f32.mrb[0].mxu0
    %v400 = vpop.f32.mrb[0].mxu0
    %401 = vdwg.mxu0
    %402 = vmatprep.subr.bf16.mxu0 %v284
    %403 = vmatpush1.bf16.msra.mxu0 %v283
    %404 = vmatprep.subr.bf16.mxu0 %v289
    %405 = vmatpush1.bf16.msra.mxu0 %v288
    %406 = vmatprep.subr.bf16.mxu0 %v294
    %407 = vmatpush1.bf16.msra.mxu0 %v293
    %408 = vmatprep.subr.bf16.mxu0 %v299
    %409 = vmatpush1.bf16.msra.mxu0 %v298
    %410 = vmatprep.subr.bf16.mxu0 %v304
    %411 = vmatpush1.bf16.msra.mxu0 %v303
    %412 = vmatprep.subr.bf16.mxu0 %v309
    %413 = vmatpush1.bf16.msra.mxu0 %v308
    %414 = vmatprep.subr.bf16.mxu0 %v314
    %415 = vmatpush1.bf16.msra.mxu0 %v313
    %416 = vmatprep.subr.bf16.mxu0 %v319
    %417 = vmatpush1.bf16.msra.mxu0 %v318
    %418 = vmatprep.subr.bf16.mxu0 0
    %419 = vmatpush1.bf16.msra.mxu0 0
    %420 = vmatprep.subr.bf16.mxu0 0
    %421 = vmatpush1.bf16.msra.mxu0 0
    %422 = vmatprep.subr.bf16.mxu0 0
    %423 = vmatpush1.bf16.msra.mxu0 0
    %424 = vmatprep.subr.bf16.mxu0 0
    %425 = vmatpush1.bf16.msra.mxu0 0
    %426 = vmatprep.subr.bf16.mxu0 0
    %427 = vmatpush1.bf16.msra.mxu0 0
    %428 = vmatprep.subr.bf16.mxu0 0
    %429 = vmatpush1.bf16.msra.mxu0 0
    %430 = vmatprep.subr.bf16.mxu0 0
    %431 = vmatpush1.bf16.msra.mxu0 0
    %432 = vmatprep.subr.bf16.mxu0 0
    %433 = vmatpush1.bf16.msra.mxu0 0
    %434 = vmatprep.mubr.bf16.mxu0 0
    %435 = vmatmul.mubr.bf16.gmra.mrb[0].mxu0 %v77
    %v436 = vpop.f32.mrb[0].mxu0
    %v437 = vadd.f32 %v139, %v436
    %v438 = vpop.f32.mrb[0].mxu0
    %v439 = vadd.f32 %v143, %v438
    %v440 = vpop.f32.mrb[0].mxu0
    %v441 = vpop.f32.mrb[0].mxu0
    %442 = vdwg.mxu0
    %443 = vmatprep.subr.bf16.mxu0 0
    %444 = vmatpush1.bf16.msra.mxu0 %v285
    %445 = vmatprep.subr.bf16.mxu0 0
    %446 = vmatpush1.bf16.msra.mxu0 %v290
    %447 = vmatprep.subr.bf16.mxu0 0
    %448 = vmatpush1.bf16.msra.mxu0 %v295
    %449 = vmatprep.subr.bf16.mxu0 0
    %450 = vmatpush1.bf16.msra.mxu0 %v300
    %451 = vmatprep.subr.bf16.mxu0 0
    %452 = vmatpush1.bf16.msra.mxu0 %v305
    %453 = vmatprep.subr.bf16.mxu0 0
    %454 = vmatpush1.bf16.msra.mxu0 %v310
    %455 = vmatprep.subr.bf16.mxu0 0
    %456 = vmatpush1.bf16.msra.mxu0 %v315
    %457 = vmatprep.subr.bf16.mxu0 0
    %458 = vmatpush1.bf16.msra.mxu0 %v320
    %459 = vmatprep.subr.bf16.mxu0 0
    %460 = vmatpush1.bf16.msra.mxu0 0
    %461 = vmatprep.subr.bf16.mxu0 0
    %462 = vmatpush1.bf16.msra.mxu0 0
    %463 = vmatprep.subr.bf16.mxu0 0
    %464 = vmatpush1.bf16.msra.mxu0 0
    %465 = vmatprep.subr.bf16.mxu0 0
    %466 = vmatpush1.bf16.msra.mxu0 0
    %467 = vmatprep.subr.bf16.mxu0 0
    %468 = vmatpush1.bf16.msra.mxu0 0
    %469 = vmatprep.subr.bf16.mxu0 0
    %470 = vmatpush1.bf16.msra.mxu0 0
    %471 = vmatprep.subr.bf16.mxu0 0
    %472 = vmatpush1.bf16.msra.mxu0 0
    %473 = vmatprep.subr.bf16.mxu0 0
    %474 = vmatpush1.bf16.msra.mxu0 0
    %475 = vmatprep.mubr.bf16.mxu0 0
    %476 = vmatmul.mubr.bf16.gmra.mrb[0].mxu0 %v77
    %v477 = vpop.f32.mrb[0].mxu0
    %v478 = vadd.f32 %v147, %v477
    %v479 = vpop.f32.mrb[0].mxu0
    %v480 = vpop.f32.mrb[0].mxu0
    %v481 = vpop.f32.mrb[0].mxu0
    %482 = vdwg.mxu0
    %v483 = vlaneseq
    %v484 = vand.u32 %v483, 127
    %vm485 = vcmp.lt.s32.totalorder %v484, 32
    %v486 = vsel %vm485, 1, 0
    %v487 = vcvt.s32.f32 %v486
    %v488 = vmul.f32 %v68, %v487
    %489 = vadd.xlane.f32.xlu0 %v488
    %v490 = vpop.xlane.xlu0 %489
    %v491 = vmul.f32 %v490, 0.03125
    %v492 = vsub.f32 %v68, %v491
    %v493 = vmul.f32 %v492, %v487
    %v494 = vmul.f32 %v493, %v493
    %495 = vadd.xlane.f32.xlu0 %v494
    %v496 = vpop.xlane.xlu0 %495
    %v497 = vmul.f32 %v496, 0.03125
    %v498 = vadd.f32 %v497, 1e-06
    %v499 = vrsqrt.pop %v498
    %v500 = vmul.f32 %v493, %v499
    %v501 = vadd.f32 %v437, 1.0
    %v502 = vmul.f32 %v500, %v501
    %v503 = vadd.f32 %v502, %v398
    %v504 = vpack.c.bf16 %v503, %v503
    %v505 = vld [vmem:[%s4] sm:$0xf]
    %v506 = vld [vmem:[%s4 + $0x4] sm:$0xf]
    %v507 = vld [vmem:[%s4 + $0x8] sm:$0xf]
    %v508 = vld [vmem:[%s4 + $0xc] sm:$0xf]
    %v509 = vld [vmem:[%s4 + $0x10] sm:$0xf]
    %v510 = vld [vmem:[%s4 + $0x14] sm:$0xf]
    %v511 = vld [vmem:[%s4 + $0x18] sm:$0xf]
    %v512 = vld [vmem:[%s4 + $0x1c] sm:$0xf]
    %v513 = vld [vmem:[%s4 + $0x20] sm:$0xf]
    %v514 = vld [vmem:[%s4 + $0x24] sm:$0xf]
    %v515 = vld [vmem:[%s4 + $0x28] sm:$0xf]
    %v516 = vld [vmem:[%s4 + $0x2c] sm:$0xf]
    %v517 = vld [vmem:[%s4 + $0x30] sm:$0xf]
    %v518 = vld [vmem:[%s4 + $0x34] sm:$0xf]
    %v519 = vld [vmem:[%s4 + $0x38] sm:$0xf]
    %v520 = vld [vmem:[%s4 + $0x3c] sm:$0xf]
    %v521 = vld [vmem:[%s5] sm:$0x1]
    %v523 = vlaneseq
    %v524 = vshrl.u32 %v523, 7
    %v525 = vsub.s32 0, %v524
    %v526 = vrot.slane %v521, %v525
    %v544 = vunpack.c.l.b16 %v505
    %v545 = vunpack.c.l.b16 %v506
    %v546 = vunpack.c.l.b16 %v507
    %v547 = vunpack.c.l.b16 %v508
    %v548 = vunpack.c.l.b16 %v509
    %v549 = vunpack.c.l.b16 %v510
    %v550 = vunpack.c.l.b16 %v511
    %v551 = vunpack.c.l.b16 %v512
    %v552 = vunpack.c.l.b16 %v513
    %v553 = vunpack.c.l.b16 %v514
    %v554 = vunpack.c.l.b16 %v515
    %v555 = vunpack.c.l.b16 %v516
    %v556 = vunpack.c.l.b16 %v517
    %v557 = vunpack.c.l.b16 %v518
    %v558 = vunpack.c.l.b16 %v519
    %v559 = vunpack.c.l.b16 %v520
    %v560 = vpack.c.b16 %v545, %v544
    %v561 = vpack.c.b16 %v547, %v546
    %v562 = vpack.c.b16 %v549, %v548
    %v563 = vpack.c.b16 %v551, %v550
    %v564 = vpack.c.b16 %v553, %v552
    %v565 = vpack.c.b16 %v555, %v554
    %v566 = vpack.c.b16 %v557, %v556
    %v567 = vpack.c.b16 %v559, %v558
    %576 = vmatprep.subr.bf16.mxu0 0
    %577 = vmatpush1.bf16.msra.mxu0 %v560
    %578 = vmatprep.subr.bf16.mxu0 0
    %579 = vmatpush1.bf16.msra.mxu0 %v561
    %580 = vmatprep.subr.bf16.mxu0 0
    %581 = vmatpush1.bf16.msra.mxu0 %v562
    %582 = vmatprep.subr.bf16.mxu0 0
    %583 = vmatpush1.bf16.msra.mxu0 %v563
    %584 = vmatprep.subr.bf16.mxu0 0
    %585 = vmatpush1.bf16.msra.mxu0 %v564
    %586 = vmatprep.subr.bf16.mxu0 0
    %587 = vmatpush1.bf16.msra.mxu0 %v565
    %588 = vmatprep.subr.bf16.mxu0 0
    %589 = vmatpush1.bf16.msra.mxu0 %v566
    %590 = vmatprep.subr.bf16.mxu0 0
    %591 = vmatpush1.bf16.msra.mxu0 %v567
    %592 = vmatprep.subr.bf16.mxu0 0
    %593 = vmatpush1.bf16.msra.mxu0 0
    %594 = vmatprep.subr.bf16.mxu0 0
    %595 = vmatpush1.bf16.msra.mxu0 0
    %596 = vmatprep.subr.bf16.mxu0 0
    %597 = vmatpush1.bf16.msra.mxu0 0
    %598 = vmatprep.subr.bf16.mxu0 0
    %599 = vmatpush1.bf16.msra.mxu0 0
    %600 = vmatprep.subr.bf16.mxu0 0
    %601 = vmatpush1.bf16.msra.mxu0 0
    %602 = vmatprep.subr.bf16.mxu0 0
    %603 = vmatpush1.bf16.msra.mxu0 0
    %604 = vmatprep.subr.bf16.mxu0 0
    %605 = vmatpush1.bf16.msra.mxu0 0
    %606 = vmatprep.subr.bf16.mxu0 0
    %607 = vmatpush1.bf16.msra.mxu0 0
    %608 = vmatprep.mubr.bf16.mxu0 0
    %609 = vmatmul.mubr.bf16.gmra.mrb[0].mxu0 %v504
    %v610 = vpop.f32.mrb[0].mxu0
    %v611 = vadd.f32 %v526, %v610
    %v612 = vpop.f32.mrb[0].mxu0
    %v613 = vpop.f32.mrb[0].mxu0
    %v614 = vpop.f32.mrb[0].mxu0
    %615 = vdwg.mxu0
    %v616 = vmul.f32 %v611, 0.5
    %v617 = vmul.f32 %v611, 0.044715
    %v618 = vmul.f32 %v617, %v611
    %v619 = vmul.f32 %v618, %v611
    %v620 = vadd.f32 %v611, %v619
    %v621 = vmul.f32 %v620, 0.7978846
    %v622 = vtanh.pop %v621
    %v623 = vadd.f32 %v622, 1.0
    %v624 = vmul.f32 %v616, %v623
    %v625 = vpack.c.bf16 %v624, %v624
    %v626 = vld [vmem:[%s6] sm:$0xf]
    %v627 = vld [vmem:[%s6 + $0x4] sm:$0xf]
    %v628 = vld [vmem:[%s6 + $0x8] sm:$0xf]
    %v629 = vld [vmem:[%s6 + $0xc] sm:$0xf]
    %v630 = vld [vmem:[%s6 + $0x10] sm:$0xf]
    %v631 = vld [vmem:[%s6 + $0x14] sm:$0xf]
    %v632 = vld [vmem:[%s6 + $0x18] sm:$0xf]
    %v633 = vld [vmem:[%s6 + $0x1c] sm:$0xf]
    %v634 = vld [vmem:[%s6 + $0x20] sm:$0xf]
    %v635 = vld [vmem:[%s6 + $0x24] sm:$0xf]
    %v636 = vld [vmem:[%s6 + $0x28] sm:$0xf]
    %v637 = vld [vmem:[%s6 + $0x2c] sm:$0xf]
    %v638 = vld [vmem:[%s6 + $0x30] sm:$0xf]
    %v639 = vld [vmem:[%s6 + $0x34] sm:$0xf]
    %v640 = vld [vmem:[%s6 + $0x38] sm:$0xf]
    %v641 = vld [vmem:[%s6 + $0x3c] sm:$0xf]
    %v642 = vld [vmem:[#allocation7] sm:$0x1]
    %v644 = vlaneseq
    %v645 = vshrl.u32 %v644, 7
    %v646 = vsub.s32 0, %v645
    %v647 = vrot.slane %v642, %v646
    %v665 = vunpack.c.l.b16 %v626
    %v666 = vunpack.c.l.b16 %v627
    %v667 = vunpack.c.l.b16 %v628
    %v668 = vunpack.c.l.b16 %v629
    %v669 = vunpack.c.l.b16 %v630
    %v670 = vunpack.c.l.b16 %v631
    %v671 = vunpack.c.l.b16 %v632
    %v672 = vunpack.c.l.b16 %v633
    %v673 = vunpack.c.l.b16 %v634
    %v674 = vunpack.c.l.b16 %v635
    %v675 = vunpack.c.l.b16 %v636
    %v676 = vunpack.c.l.b16 %v637
    %v677 = vunpack.c.l.b16 %v638
    %v678 = vunpack.c.l.b16 %v639
    %v679 = vunpack.c.l.b16 %v640
    %v680 = vunpack.c.l.b16 %v641
    %v681 = vpack.c.b16 %v666, %v665
    %v682 = vpack.c.b16 %v668, %v667
    %v683 = vpack.c.b16 %v670, %v669
    %v684 = vpack.c.b16 %v672, %v671
    %v685 = vpack.c.b16 %v674, %v673
    %v686 = vpack.c.b16 %v676, %v675
    %v687 = vpack.c.b16 %v678, %v677
    %v688 = vpack.c.b16 %v680, %v679
    %697 = vmatprep.subr.bf16.mxu0 0
    %698 = vmatpush1.bf16.msra.mxu0 %v681
    %699 = vmatprep.subr.bf16.mxu0 0
    %700 = vmatpush1.bf16.msra.mxu0 %v682
    %701 = vmatprep.subr.bf16.mxu0 0
    %702 = vmatpush1.bf16.msra.mxu0 %v683
    %703 = vmatprep.subr.bf16.mxu0 0
    %704 = vmatpush1.bf16.msra.mxu0 %v684
    %705 = vmatprep.subr.bf16.mxu0 0
    %706 = vmatpush1.bf16.msra.mxu0 %v685
    %707 = vmatprep.subr.bf16.mxu0 0
    %708 = vmatpush1.bf16.msra.mxu0 %v686
    %709 = vmatprep.subr.bf16.mxu0 0
    %710 = vmatpush1.bf16.msra.mxu0 %v687
    %711 = vmatprep.subr.bf16.mxu0 0
    %712 = vmatpush1.bf16.msra.mxu0 %v688
    %713 = vmatprep.subr.bf16.mxu0 0
    %714 = vmatpush1.bf16.msra.mxu0 0
    %715 = vmatprep.subr.bf16.mxu0 0
    %716 = vmatpush1.bf16.msra.mxu0 0
    %717 = vmatprep.subr.bf16.mxu0 0
    %718 = vmatpush1.bf16.msra.mxu0 0
    %719 = vmatprep.subr.bf16.mxu0 0
    %720 = vmatpush1.bf16.msra.mxu0 0
    %721 = vmatprep.subr.bf16.mxu0 0
    %722 = vmatpush1.bf16.msra.mxu0 0
    %723 = vmatprep.subr.bf16.mxu0 0
    %724 = vmatpush1.bf16.msra.mxu0 0
    %725 = vmatprep.subr.bf16.mxu0 0
    %726 = vmatpush1.bf16.msra.mxu0 0
    %727 = vmatprep.subr.bf16.mxu0 0
    %728 = vmatpush1.bf16.msra.mxu0 0
    %729 = vmatprep.mubr.bf16.mxu0 0
    %730 = vmatmul.mubr.bf16.gmra.mrb[0].mxu0 %v625
    %v731 = vpop.f32.mrb[0].mxu0
    %v732 = vadd.f32 %v647, %v731
    %v733 = vpop.f32.mrb[0].mxu0
    %v734 = vpop.f32.mrb[0].mxu0
    %v735 = vpop.f32.mrb[0].mxu0
    %736 = vdwg.mxu0
    %v737 = vmul.f32 %v396, %v732
    %v738 = vadd.f32 %v68, %v737
    %v739 = vmul.f32 %v738, %v487
    %740 = vadd.xlane.f32.xlu0 %v739
    %v741 = vpop.xlane.xlu0 %740
    %v742 = vmul.f32 %v741, 0.03125
    %v743 = vsub.f32 %v738, %v742
    %v744 = vmul.f32 %v743, %v487
    %v745 = vmul.f32 %v744, %v744
    %746 = vadd.xlane.f32.xlu0 %v745
    %v747 = vpop.xlane.xlu0 %746
    %v748 = vmul.f32 %v747, 0.03125
    %v749 = vadd.f32 %v748, 1e-06
    %v750 = vrsqrt.pop %v749
    %v751 = vmul.f32 %v744, %v750
    %v752 = vadd.f32 %v478, 1.0
    %v753 = vmul.f32 %v751, %v752
    %v754 = vadd.f32 %v753, %v439
    %755 = vst [vmem:[#allocation8] sm:$0xff] %v754
    // Predicated region
    $region46: #{film_forward.1} parent=1 // pred_check
      _
    $region47: #{film_forward.1} parent=1 // pred_check_branch
      %757 = sbr.rel (0) target = $region49
    $region48: #{film_forward.1} parent=1 // pred_region
      %s759 = ssub.s32 128, 128
      %760 = vsyncadd [#allocation4], %s759
      %s762 = sshll.u32 [#allocation8], 4
      %s763 = int_to_ptr.vmem [resolvable:$true] %s762
      %765 = dma.vmem_to_hbm [thread:$0]  %s763, 128, %s8, [#allocation4]
    $region49: #{film_forward.1} parent=1 // pred_fallthru
      _
    // Predicated region
    $region50: #{film_forward.1} parent=1 // pred_check
      _
    $region51: #{film_forward.1} parent=1 // pred_check_branch
      %767 = sbr.rel (0) target = $region53
    $region52: #{film_forward.1} parent=1 // pred_region
      %768 = dma.done [#allocation4], 128
    $region53: #{film_forward.1} parent=1 // pred_fallthru
      _
    %769 = vsyncpa [#allocation3], 1
    %770 = vsyncpa [#allocation6], 1
    %771 = vsyncpa [#allocation4], 1

</llo_original>
